<compile_context>
chip_gen: v5e
topology: v5e:2x2
jax: 0.10.0
libtpu: 0.0.40
codegen_flags: <defaults>
</compile_context>

<pallas_src>
import functools

import jax
import jax.numpy as jnp
import numpy as np
from jax.experimental import pallas as pl
from jax.experimental.pallas import tpu as pltpu


def _poscnn_kernel(x_ref, w_ref, b_ref, o_ref, *, img_w, n_valid):
    """One (batch, channel-tile) grid step.

    x_ref: (Np, TC)  flattened H*W pixels (channels on lanes), Np >= n_valid
    w_ref: (9, TC)   depthwise 3x3 taps, row-major (ky*3 + kx), per channel
    b_ref: (1, TC)   bias
    o_ref: (Np, TC)  dwconv3x3(x) + bias + x; rows >= n_valid are don't-care
    """
    n_pad, tc = x_ref.shape
    f32 = jnp.float32

    # Single cast per element; all math in f32.
    x = x_ref[...].astype(f32)                         # (Np, TC)
    w = w_ref[...].astype(f32)                         # (9, TC)
    b = b_ref[...].astype(f32)                         # (1, TC)

    # Hoisted per-tap (1, TC) weight rows; residual folded into the centre tap.
    k = [w[i:i + 1, :] for i in range(9)]
    k_c = k[4] + 1.0                                   # fused "+ x" residual (f32)

    # Edge-validity masks along the flattened H*W (sublane) axis.
    iota = jax.lax.broadcasted_iota(jnp.int32, (n_pad, 1), 0)
    col = iota % img_w
    m_l = (col > 0).astype(f32)                        # pixel has a left neighbour
    m_r = (col < img_w - 1).astype(f32)                # pixel has a right neighbour
    m_top = (iota >= img_w).astype(f32)                # pixel has an upper neighbour
    m_bot = (iota < n_valid - img_w).astype(f32)       # pixel has a lower neighbour

    # Horizontal neighbours: one sublane roll each (XLU); wrap killed by mask.
    xl = pltpu.roll(x, shift=1, axis=0) * m_l                  # xl[n] = x[n-1]
    xr = pltpu.roll(x, shift=n_pad - 1, axis=0) * m_r          # xr[n] = x[n+1]

    # Middle kernel row (dy = 0), plus bias, plus residual via k_c.
    acc = x * k_c + xl * k[3] + xr * k[5] + b

    # Upper kernel row (dy = -1): combine the three taps at the source row and
    # shift the sum down by one image row (W sublanes); kill the wrapped rows.
    g_top = x * k[1] + xl * k[0] + xr * k[2]
    acc = acc + pltpu.roll(g_top, shift=img_w % n_pad, axis=0) * m_top

    # Lower kernel row (dy = +1): shift the tap sum up by one image row.
    g_bot = x * k[7] + xl * k[6] + xr * k[8]
    acc = acc + pltpu.roll(g_bot, shift=(n_pad - img_w) % n_pad, axis=0) * m_bot

    o_ref[...] = acc.astype(o_ref.dtype)


def pos_cnn_forward(x, H, W, weight, bias, *, c_tile=None,
                    vmem_budget_bytes=40 * 1024 * 1024):
    """PosCNN forward (q_to_ab=None, s=1 path).

    x: (B, N, C) with N = H*W.  weight: (C, 1, 3, 3) PyTorch depthwise layout
    (groups=C).  bias: (C,).  Returns (B, N, C) = flatten(dwconv3x3(x) + x).
    """
    B, N, C = x.shape
    assert N == H * W, "sequence length must equal H*W"
    assert weight.shape == (C, 1, 3, 3) and bias.shape == (C,)

    in_bytes = jnp.dtype(x.dtype).itemsize
    out_bytes = in_bytes

    # Pad the sequence axis to a sublane-tile multiple so the whole-tile
    # sublane rolls stay on the fast path (only triggers for e.g. 7x7 = 49).
    row_align = max(8, 32 // in_bytes)
    n_pad = ((N + row_align - 1) // row_align) * row_align
    x_in = x if n_pad == N else jnp.pad(x, ((0, 0), (0, n_pad - N), (0, 0)))

    def _blk_bytes(ct):
        blk = n_pad * ct
        # 2x double-buffered input + output blocks + ~6 f32 whole-tile temporaries.
        return blk * (2 * in_bytes + 2 * out_bytes + 6 * 4)

    if c_tile is None:
        if C <= 128 or _blk_bytes(C) <= vmem_budget_bytes:
            c_tile = C                                   # full-C contiguous DMA
        else:
            cands = [d for d in range(128, C, 128)
                     if C % d == 0 and _blk_bytes(d) <= vmem_budget_bytes]
            c_tile = max(cands) if cands else (128 if C % 128 == 0 else C)
    assert C % c_tile == 0
    num_c = C // c_tile

    # (C, 1, 3, 3) -> (9, C), taps row-major (ky*3 + kx).
    w9 = jnp.transpose(weight.reshape(C, 9), (1, 0)).astype(jnp.float32)
    b2 = bias.reshape(1, C).astype(jnp.float32)

    kernel = functools.partial(_poscnn_kernel, img_w=W, n_valid=N)

    vmem_limit = int(min(128 * 1024 * 1024,
                         max(48 * 1024 * 1024, _blk_bytes(c_tile) + (4 << 20))))

    cost = pl.CostEstimate(
        flops=22 * B * N * C,
        transcendentals=0,
        bytes_accessed=B * N * C * (in_bytes + out_bytes) + 10 * C * 4)

    out = pl.pallas_call(
        kernel,
        out_shape=jax.ShapeDtypeStruct((B, n_pad, C), x.dtype),
        grid_spec=pltpu.PrefetchScalarGridSpec(
            num_scalar_prefetch=0,
            grid=(B, num_c),
            in_specs=[
                pl.BlockSpec((None, n_pad, c_tile), lambda b, c: (b, 0, c)),
                pl.BlockSpec((9, c_tile), lambda b, c: (0, c)),
                pl.BlockSpec((1, c_tile), lambda b, c: (0, c)),
            ],
            out_specs=pl.BlockSpec((None, n_pad, c_tile), lambda b, c: (b, 0, c)),
        ),
        compiler_params=pltpu.CompilerParams(
            dimension_semantics=("parallel", "parallel"),
            vmem_limit_bytes=vmem_limit),
        cost_estimate=cost,
    )(x_in, w9, b2)

    return out if n_pad == N else out[:, :N, :]


def _reference(x, H, W, weight, bias):
    """Pure-JAX reference (depthwise conv via lax.conv_general_dilated)."""
    B, N, C = x.shape
    feat = x.reshape(B, H, W, C)                             # NHWC
    k = jnp.transpose(weight, (2, 3, 1, 0))                  # (3, 3, 1, C) HWIO
    conv = jax.lax.conv_general_dilated(
        feat, k, window_strides=(1, 1), padding=((1, 1), (1, 1)),
        dimension_numbers=("NHWC", "HWIO", "NHWC"), feature_group_count=C)
    return (conv + bias.reshape(1, 1, 1, C) + feat).reshape(B, N, C)


def _make_params(key, C):
    kw, kb = jax.random.split(key)
    bound = 1.0 / np.sqrt(9.0)
    weight = jax.random.uniform(kw, (C, 1, 3, 3), minval=-bound, maxval=bound,
                                dtype=jnp.float32)
    bias = jax.random.uniform(kb, (C,), minval=-bound, maxval=bound,
                              dtype=jnp.float32)
    return weight, bias


if __name__ == "__main__":
    keys = jax.random.split(jax.random.PRNGKey(0), 8)

    def run_case(kx, kp, B, H, W, C, dtype, c_tile=None, rtol=1e-5, atol=1e-5):
        N = H * W
        x = jax.random.normal(kx, (B, N, C), dtype=jnp.float32).astype(dtype)
        weight, bias = _make_params(kp, C)
        out = jax.block_until_ready(
            pos_cnn_forward(x, H, W, weight, bias, c_tile=c_tile))
        ref = jax.block_until_ready(
            _reference(x.astype(jnp.float32), H, W, weight, bias))
        np.testing.assert_allclose(np.asarray(out, dtype=np.float32),
                                   np.asarray(ref), rtol=rtol, atol=atol)

    # 1) Small channel count (C < 128): single channel tile.
    run_case(keys[0], keys[1], B=2, H=8, W=8, C=32, dtype=jnp.float32)
    # 2) Full-C contiguous block (default fast path), grid (B, 1).
    run_case(keys[2], keys[3], B=2, H=16, W=16, C=256, dtype=jnp.float32)
    # 3) Forced channel tiling (exercise the fallback path), grid (B, 2).
    run_case(keys[2], keys[3], B=2, H=16, W=16, C=256, dtype=jnp.float32,
             c_tile=128)
    # 4) H*W not a sublane multiple (7x7 stage): padded-rows path.
    run_case(keys[4], keys[5], B=1, H=7, W=7, C=32, dtype=jnp.float32)
    # 5) bf16 storage (in-kernel compute stays f32).
    run_case(keys[6], keys[7], B=2, H=8, W=8, C=64, dtype=jnp.bfloat16,
             rtol=5e-2, atol=5e-2)

    print("KERNEL_OK")
</pallas_src>

<mosaic_0001>
module attributes {stable_mosaic.version = 11 : i64} {
  func.func @_poscnn_kernel(%arg0: i32, %arg1: i32, %arg2: memref<1x64x32xf32, #tpu.memory_space<vmem>>, %arg3: memref<9x32xf32, #tpu.memory_space<vmem>>, %arg4: memref<1x32xf32, #tpu.memory_space<vmem>>, %arg5: memref<1x64x32xf32, #tpu.memory_space<vmem>>) attributes {dimension_semantics = [#tpu.dimension_semantics<parallel>, #tpu.dimension_semantics<parallel>], iteration_bounds = array<i64: 2, 1>, scalar_prefetch = 0 : i64, scratch_operands = 0 : i64, tpu.core_type = #tpu.core_type<tc>, window_params = [{transform_indices = @transform_0, window_bounds = array<i64: 1, 64, 32>}, {transform_indices = @transform_1, window_bounds = array<i64: 9, 32>}, {transform_indices = @transform_2, window_bounds = array<i64: 1, 32>}, {transform_indices = @transform_3, window_bounds = array<i64: 1, 64, 32>}]} {
    %c0 = arith.constant 0 : index
    %c0_0 = arith.constant 0 : index
    %c0_1 = arith.constant 0 : index
    %0 = vector.load %arg2[%c0, %c0_0, %c0_1] : memref<1x64x32xf32, #tpu.memory_space<vmem>>, vector<1x64x32xf32>
    %1 = vector.shape_cast %0 : vector<1x64x32xf32> to vector<64x32xf32>
    %c0_2 = arith.constant 0 : index
    %c0_3 = arith.constant 0 : index
    %2 = vector.load %arg3[%c0_2, %c0_3] : memref<9x32xf32, #tpu.memory_space<vmem>>, vector<9x32xf32>
    %c0_4 = arith.constant 0 : index
    %c0_5 = arith.constant 0 : index
    %3 = vector.load %arg4[%c0_4, %c0_5] : memref<1x32xf32, #tpu.memory_space<vmem>>, vector<1x32xf32>
    %4 = vector.extract_strided_slice %2 {offsets = [0, 0], sizes = [1, 32], strides = [1, 1]} : vector<9x32xf32> to vector<1x32xf32>
    %5 = vector.extract_strided_slice %2 {offsets = [1, 0], sizes = [1, 32], strides = [1, 1]} : vector<9x32xf32> to vector<1x32xf32>
    %6 = vector.extract_strided_slice %2 {offsets = [2, 0], sizes = [1, 32], strides = [1, 1]} : vector<9x32xf32> to vector<1x32xf32>
    %7 = vector.extract_strided_slice %2 {offsets = [3, 0], sizes = [1, 32], strides = [1, 1]} : vector<9x32xf32> to vector<1x32xf32>
    %8 = vector.extract_strided_slice %2 {offsets = [4, 0], sizes = [1, 32], strides = [1, 1]} : vector<9x32xf32> to vector<1x32xf32>
    %9 = vector.extract_strided_slice %2 {offsets = [5, 0], sizes = [1, 32], strides = [1, 1]} : vector<9x32xf32> to vector<1x32xf32>
    %10 = vector.extract_strided_slice %2 {offsets = [6, 0], sizes = [1, 32], strides = [1, 1]} : vector<9x32xf32> to vector<1x32xf32>
    %11 = vector.extract_strided_slice %2 {offsets = [7, 0], sizes = [1, 32], strides = [1, 1]} : vector<9x32xf32> to vector<1x32xf32>
    %12 = vector.extract_strided_slice %2 {offsets = [8, 0], sizes = [1, 32], strides = [1, 1]} : vector<9x32xf32> to vector<1x32xf32>
    %cst = arith.constant 1.000000e+00 : f32
    %13 = vector.broadcast %cst : f32 to vector<1x32xf32>
    %14 = arith.addf %8, %13 : vector<1x32xf32>
    %15 = tpu.iota {dimensions = array<i32: 0>} : vector<64x1xi32>
    %c8_i32 = arith.constant 8 : i32
    %c0_i32 = arith.constant 0 : i32
    %16 = arith.cmpi eq, %c8_i32, %c0_i32 : i32
    %c1_i32 = arith.constant 1 : i32
    %17 = arith.select %16, %c1_i32, %c8_i32 : i32
    %18 = vector.broadcast %17 : i32 to vector<64x1xi32>
    %19 = arith.remsi %15, %18 : vector<64x1xi32>
    %c0_i32_6 = arith.constant 0 : i32
    %20 = vector.broadcast %c0_i32_6 : i32 to vector<64x1xi32>
    %21 = arith.cmpi ne, %19, %20 : vector<64x1xi32>
    %c0_i32_7 = arith.constant 0 : i32
    %22 = vector.broadcast %c0_i32_7 : i32 to vector<64x1xi32>
    %23 = arith.cmpi slt, %19, %22 : vector<64x1xi32>
    %c0_i32_8 = arith.constant 0 : i32
    %24 = arith.cmpi slt, %17, %c0_i32_8 : i32
    %25 = vector.broadcast %24 : i1 to vector<64x1xi1>
    %26 = vector.broadcast %25 : vector<64x1xi1> to vector<64x1xi1>
    %27 = arith.xori %23, %26 : vector<64x1xi1>
    %28 = arith.andi %27, %21 : vector<64x1xi1>
    %29 = vector.broadcast %17 : i32 to vector<64x1xi32>
    %30 = arith.addi %19, %29 : vector<64x1xi32>
    %31 = arith.select %28, %30, %19 : vector<64x1xi1>, vector<64x1xi32>
    %c0_i32_9 = arith.constant 0 : i32
    %32 = vector.broadcast %c0_i32_9 : i32 to vector<64x1xi32>
    %33 = arith.cmpi sgt, %31, %32 : vector<64x1xi32>
    %34 = arith.extui %33 : vector<64x1xi1> to vector<64x1xi32>
    %35 = arith.sitofp %34 : vector<64x1xi32> to vector<64x1xf32>
    %c7_i32 = arith.constant 7 : i32
    %36 = vector.broadcast %c7_i32 : i32 to vector<64x1xi32>
    %37 = arith.cmpi slt, %31, %36 : vector<64x1xi32>
    %38 = arith.extui %37 : vector<64x1xi1> to vector<64x1xi32>
    %39 = arith.sitofp %38 : vector<64x1xi32> to vector<64x1xf32>
    %c8_i32_10 = arith.constant 8 : i32
    %40 = vector.broadcast %c8_i32_10 : i32 to vector<64x1xi32>
    %41 = arith.cmpi sge, %15, %40 : vector<64x1xi32>
    %42 = arith.extui %41 : vector<64x1xi1> to vector<64x1xi32>
    %43 = arith.sitofp %42 : vector<64x1xi32> to vector<64x1xf32>
    %c56_i32 = arith.constant 56 : i32
    %44 = vector.broadcast %c56_i32 : i32 to vector<64x1xi32>
    %45 = arith.cmpi slt, %15, %44 : vector<64x1xi32>
    %46 = arith.extui %45 : vector<64x1xi1> to vector<64x1xi32>
    %47 = arith.sitofp %46 : vector<64x1xi32> to vector<64x1xf32>
    %c1_i32_11 = arith.constant 1 : i32
    %48 = tpu.dynamic_rotate %1 by %c1_i32_11 dim 0 : vector<64x32xf32>, i32 -> vector<64x32xf32>
    %49 = vector.broadcast %35 : vector<64x1xf32> to vector<64x32xf32>
    %50 = arith.mulf %48, %49 : vector<64x32xf32>
    %c63_i32 = arith.constant 63 : i32
    %51 = tpu.dynamic_rotate %1 by %c63_i32 dim 0 : vector<64x32xf32>, i32 -> vector<64x32xf32>
    %52 = vector.broadcast %39 : vector<64x1xf32> to vector<64x32xf32>
    %53 = arith.mulf %51, %52 : vector<64x32xf32>
    %54 = vector.broadcast %14 : vector<1x32xf32> to vector<64x32xf32>
    %55 = arith.mulf %1, %54 : vector<64x32xf32>
    %56 = vector.broadcast %7 : vector<1x32xf32> to vector<64x32xf32>
    %57 = arith.mulf %50, %56 : vector<64x32xf32>
    %58 = arith.addf %55, %57 : vector<64x32xf32>
    %59 = vector.broadcast %9 : vector<1x32xf32> to vector<64x32xf32>
    %60 = arith.mulf %53, %59 : vector<64x32xf32>
    %61 = arith.addf %58, %60 : vector<64x32xf32>
    %62 = vector.broadcast %3 : vector<1x32xf32> to vector<64x32xf32>
    %63 = arith.addf %61, %62 : vector<64x32xf32>
    %64 = vector.broadcast %5 : vector<1x32xf32> to vector<64x32xf32>
    %65 = arith.mulf %1, %64 : vector<64x32xf32>
    %66 = vector.broadcast %4 : vector<1x32xf32> to vector<64x32xf32>
    %67 = arith.mulf %50, %66 : vector<64x32xf32>
    %68 = arith.addf %65, %67 : vector<64x32xf32>
    %69 = vector.broadcast %6 : vector<1x32xf32> to vector<64x32xf32>
    %70 = arith.mulf %53, %69 : vector<64x32xf32>
    %71 = arith.addf %68, %70 : vector<64x32xf32>
    %c8_i32_12 = arith.constant 8 : i32
    %72 = tpu.dynamic_rotate %71 by %c8_i32_12 dim 0 : vector<64x32xf32>, i32 -> vector<64x32xf32>
    %73 = vector.broadcast %43 : vector<64x1xf32> to vector<64x32xf32>
    %74 = arith.mulf %72, %73 : vector<64x32xf32>
    %75 = arith.addf %63, %74 : vector<64x32xf32>
    %76 = vector.broadcast %11 : vector<1x32xf32> to vector<64x32xf32>
    %77 = arith.mulf %1, %76 : vector<64x32xf32>
    %78 = vector.broadcast %10 : vector<1x32xf32> to vector<64x32xf32>
    %79 = arith.mulf %50, %78 : vector<64x32xf32>
    %80 = arith.addf %77, %79 : vector<64x32xf32>
    %81 = vector.broadcast %12 : vector<1x32xf32> to vector<64x32xf32>
    %82 = arith.mulf %53, %81 : vector<64x32xf32>
    %83 = arith.addf %80, %82 : vector<64x32xf32>
    %c56_i32_13 = arith.constant 56 : i32
    %84 = tpu.dynamic_rotate %83 by %c56_i32_13 dim 0 : vector<64x32xf32>, i32 -> vector<64x32xf32>
    %85 = vector.broadcast %47 : vector<64x1xf32> to vector<64x32xf32>
    %86 = arith.mulf %84, %85 : vector<64x32xf32>
    %87 = arith.addf %75, %86 : vector<64x32xf32>
    %c0_14 = arith.constant 0 : index
    %c0_15 = arith.constant 0 : index
    %c0_16 = arith.constant 0 : index
    %88 = vector.load %arg5[%c0_14, %c0_15, %c0_16] : memref<1x64x32xf32, #tpu.memory_space<vmem>>, vector<1x64x32xf32>
    %89 = vector.shape_cast %88 : vector<1x64x32xf32> to vector<64x32xf32>
    %90 = vector.shape_cast %87 : vector<64x32xf32> to vector<1x64x32xf32>
    tpu.vector_store %arg5[%c0_14, %c0_15, %c0_16], %90 {strides = array<i32>} : memref<1x64x32xf32, #tpu.memory_space<vmem>>, vector<1x64x32xf32>,
    return
  }
  func.func @transform_0(%arg0: i32, %arg1: i32) -> (i32, i32, i32) {
    %c0_i32 = arith.constant 0 : i32
    %c0_i32_0 = arith.constant 0 : i32
    return %arg0, %c0_i32, %arg1 : i32, i32, i32
  }
  func.func @transform_1(%arg0: i32, %arg1: i32) -> (i32, i32) {
    %c0_i32 = arith.constant 0 : i32
    %c0_i32_0 = arith.constant 0 : i32
    return %c0_i32, %arg1 : i32, i32
  }
  func.func @transform_2(%arg0: i32, %arg1: i32) -> (i32, i32) {
    %c0_i32 = arith.constant 0 : i32
    %c0_i32_0 = arith.constant 0 : i32
    return %c0_i32, %arg1 : i32, i32
  }
  func.func @transform_3(%arg0: i32, %arg1: i32) -> (i32, i32, i32) {
    %c0_i32 = arith.constant 0 : i32
    %c0_i32_0 = arith.constant 0 : i32
    return %arg0, %c0_i32, %arg1 : i32, i32, i32
  }
}

</mosaic_0001>

<llo_original>
// kernel: tpu_custom_call.1
$region0: #{tpu_custom_call.1}
  #allocation0 [shape = 'u32[]', space=smem, size = 0x4, offset = 0x4, fixed_abs, tag = 'smem constant byte address 0x4 - core index']
  #allocation1 [shape = 'u32[72,128]{1,0:T(1,128)}', space=vmem, size = 0x9000, scoped, tag = 'internal scratch']
  %s0 = inlined_call_operand.vmem [shape: f32[2,64,32], index: 0, kind: input, shape index: {}]
  %s1 = inlined_call_operand.vmem [shape: f32[9,32], index: 1, kind: input, shape index: {}]
  %s2 = inlined_call_operand.vmem [shape: f32[1,32], index: 2, kind: input, shape index: {}]
  %s3 = inlined_call_operand.vmem [shape: f32[2,64,32], index: 3, kind: output, shape index: {}]
  %s4 = sld [smem:[#allocation0]]
  $region45: #{tpu_custom_call.1} parent=0
    _
  %s6 = ssub.s32 1, %s4
  %s7 = scalar_select 0, %s6, %s4
  loop: start=0, step=1, limit=4
  $region2: #{tpu_custom_call.1} parent=0 // loop_pre_header
    _
  $region3: #{tpu_custom_call.1} parent=0 // loop_header
    %s9 = sphi 0, %s13
    %p10 = scmp.ge.s32.totalorder %s9, 4
    %s16 = sphi 0, %s28
    %s17 = sphi 0, %s24
    %s18 = sphi 0, %s16
    %s19 = sphi 0, %s17
    %s20 = sphi 0, %s18
    %s21 = sphi 0, %s19
    %s33 = sphi 0, %s35
    %s36 = sphi 0, %s33
    %s37 = sphi 0, %s36
    %s53 = sphi 0, %s37
    %s59 = sphi 0, %s61
    %s62 = sphi 0, %s59
    %s63 = sphi 0, %s62
    %s79 = sphi 0, %s63
    %s85 = sphi 0, %s87
    %s88 = sphi 0, %s85
    %s89 = sphi 0, %s88
    %s105 = sphi 0, %s89
    %s113 = sphi 0, %s115
    %s116 = sphi 0, %s113
    %s117 = sphi 0, %s116
    %s133 = sphi 0, %s117
  $region4: #{tpu_custom_call.1} parent=0 // loop_header_branch
    %12 = sbr.rel (%p10) target = $region8
  $region5: #{tpu_custom_call.1} parent=0 // loop_body
    %s14 = ssub.s32 %s9, 1
    %s15 = ssub.s32 %s9, 2
    %s22 = sadd.s32 1, %s17
    %p23 = scmp.ge.s32.totalorder %s22, 1
    %s24 = scalar_select %p23, 0, %s22
    %s25 = sadd.s32 1, %s16
    %s26 = scalar_select %p23, %s25, %s16
    %p27 = scmp.ge.s32.totalorder %s26, 2
    %s28 = scalar_select %p27, 0, %s26
    %s29 = ssub.s32 %s16, %s28
    %s30 = ssub.s32 %s17, %s24
    %s31 = sor.u32 %s29, %s30
    %p32 = scmp.eq.s32.totalorder %s31, 0
    %s34 = sadd.s32 %s33, 1
    %s35 = scalar_select %p32, %s33, %s34
    %p38 = pneg %p32
    %p39 = scmp.eq.s32.totalorder %s9, 1
    %p40 = por %p38, %p39
    %p41 = scmp.ne.s32.totalorder %s33, %s36
    %p42 = scmp.eq.s32.totalorder %s9, 0
    %p43 = por %p41, %p42
    %p44 = scmp.ne.s32.totalorder %s33, %s36
    %p45 = scmp.eq.s32.totalorder %s14, 1
    %p46 = por %p44, %p45
    %p47 = scmp.ne.s32.totalorder %s36, %s37
    %p48 = scmp.eq.s32.totalorder %s14, 0
    %p49 = por %p47, %p48
    %p50 = scmp.ne.s32.totalorder %s36, %s37
    %p51 = scmp.eq.s32.totalorder %s15, 1
    %p52 = por %p50, %p51
    %p54 = scmp.ne.s32.totalorder %s37, %s53
    %p55 = scmp.eq.s32.totalorder %s15, 0
    %p56 = por %p54, %p55
    %s57 = ssub.s32 %s17, %s24
    %p58 = scmp.eq.s32.totalorder %s57, 0
    %s60 = sadd.s32 %s59, 1
    %s61 = scalar_select %p58, %s59, %s60
    %p64 = pneg %p58
    %p65 = scmp.eq.s32.totalorder %s9, 1
    %p66 = por %p64, %p65
    %p67 = scmp.ne.s32.totalorder %s59, %s62
    %p68 = scmp.eq.s32.totalorder %s9, 0
    %p69 = por %p67, %p68
    %p70 = scmp.ne.s32.totalorder %s59, %s62
    %p71 = scmp.eq.s32.totalorder %s14, 1
    %p72 = por %p70, %p71
    %p73 = scmp.ne.s32.totalorder %s62, %s63
    %p74 = scmp.eq.s32.totalorder %s14, 0
    %p75 = por %p73, %p74
    %p76 = scmp.ne.s32.totalorder %s62, %s63
    %p77 = scmp.eq.s32.totalorder %s15, 1
    %p78 = por %p76, %p77
    %p80 = scmp.ne.s32.totalorder %s63, %s79
    %p81 = scmp.eq.s32.totalorder %s15, 0
    %p82 = por %p80, %p81
    %s83 = ssub.s32 %s17, %s24
    %p84 = scmp.eq.s32.totalorder %s83, 0
    %s86 = sadd.s32 %s85, 1
    %s87 = scalar_select %p84, %s85, %s86
    %p90 = pneg %p84
    %p91 = scmp.eq.s32.totalorder %s9, 1
    %p92 = por %p90, %p91
    %p93 = scmp.ne.s32.totalorder %s85, %s88
    %p94 = scmp.eq.s32.totalorder %s9, 0
    %p95 = por %p93, %p94
    %p96 = scmp.ne.s32.totalorder %s85, %s88
    %p97 = scmp.eq.s32.totalorder %s14, 1
    %p98 = por %p96, %p97
    %p99 = scmp.ne.s32.totalorder %s88, %s89
    %p100 = scmp.eq.s32.totalorder %s14, 0
    %p101 = por %p99, %p100
    %p102 = scmp.ne.s32.totalorder %s88, %s89
    %p103 = scmp.eq.s32.totalorder %s15, 1
    %p104 = por %p102, %p103
    %p106 = scmp.ne.s32.totalorder %s89, %s105
    %p107 = scmp.eq.s32.totalorder %s15, 0
    %p108 = por %p106, %p107
    %s109 = ssub.s32 %s16, %s28
    %s110 = ssub.s32 %s17, %s24
    %s111 = sor.u32 %s109, %s110
    %p112 = scmp.eq.s32.totalorder %s111, 0
    %s114 = sadd.s32 %s113, 1
    %s115 = scalar_select %p112, %s113, %s114
    %p118 = pneg %p112
    %p119 = scmp.eq.s32.totalorder %s9, 1
    %p120 = por %p118, %p119
    %p121 = scmp.ne.s32.totalorder %s113, %s116
    %p122 = scmp.eq.s32.totalorder %s9, 0
    %p123 = por %p121, %p122
    %p124 = scmp.ne.s32.totalorder %s113, %s116
    %p125 = scmp.eq.s32.totalorder %s14, 1
    %p126 = por %p124, %p125
    %p127 = scmp.ne.s32.totalorder %s116, %s117
    %p128 = scmp.eq.s32.totalorder %s14, 0
    %p129 = por %p127, %p128
    %p130 = scmp.ne.s32.totalorder %s116, %s117
    %p131 = scmp.eq.s32.totalorder %s15, 1
    %p132 = por %p130, %p131
    %p134 = scmp.ne.s32.totalorder %s117, %s133
    %p135 = scmp.eq.s32.totalorder %s15, 0
    %p136 = por %p134, %p135
    %p137 = scmp.le.s32.totalorder 1, %s9
    %p138 = scmp.lt.s32.totalorder %s9, 3
    %p139 = pnand %p137, %p138
    %p140 = pneg %p139
    // Predicated region
    $region9: #{tpu_custom_call.1} parent=5 // pred_check
      _
    $region10: #{tpu_custom_call.1} parent=5 // pred_check_branch
      %142 = sbr.rel (%p139) target = $region12
    $region11: #{tpu_custom_call.1} parent=5 // pred_region
      %s143 = ssub.s32 %s9, 1
      // Predicated region
      $region13: #{tpu_custom_call.1} parent=11 // pred_check
        %p144 = pneg %p75
      $region14: #{tpu_custom_call.1} parent=11 // pred_check_branch
        %146 = sbr.rel (%p144) target = $region16
      $region15: #{tpu_custom_call.1} parent=11 // pred_region
        %p147 = scmp.lt.s32.totalorder %s19, 0
        %s148 = scalar_select %p147, %s19, 0
        %s149 = smul.addr %s148, 8
        %s150 = scalar_lea.vmem %s1, %s149
      $region16: #{tpu_custom_call.1} parent=11 // pred_fallthru
        _
      // Predicated region
      $region17: #{tpu_custom_call.1} parent=11 // pred_check
        %p151 = pneg %p101
      $region18: #{tpu_custom_call.1} parent=11 // pred_check_branch
        %153 = sbr.rel (%p151) target = $region20
      $region19: #{tpu_custom_call.1} parent=11 // pred_region
        %p154 = scmp.lt.s32.totalorder %s19, 0
        %s155 = scalar_select %p154, %s19, 0
        %s156 = scalar_lea.vmem %s2, %s155
      $region20: #{tpu_custom_call.1} parent=11 // pred_fallthru
        _
    $region12: #{tpu_custom_call.1} parent=5 // pred_fallthru
      _
    %p157 = scmp.lt.s32.totalorder %s9, 2
    // Predicated region
    $region21: #{tpu_custom_call.1} parent=5 // pred_check
      %p158 = pneg %p157
    $region22: #{tpu_custom_call.1} parent=5 // pred_check_branch
      %160 = sbr.rel (%p158) target = $region24
    $region23: #{tpu_custom_call.1} parent=5 // pred_region
      // Predicated region
      $region25: #{tpu_custom_call.1} parent=23 // pred_check
        %p161 = pneg %p43
      $region26: #{tpu_custom_call.1} parent=23 // pred_check_branch
        %163 = sbr.rel (%p161) target = $region28
      $region27: #{tpu_custom_call.1} parent=23 // pred_region
        %p164 = scmp.lt.s32.totalorder %s16, 1
        %s165 = scalar_select %p164, %s16, 1
        %p166 = scmp.lt.s32.totalorder %s17, 0
        %s167 = scalar_select %p166, %s17, 0
        %s168 = smul.addr %s165, 8
        %s169 = sadd.s32 %s167, %s168
        %s170 = smul.addr %s169, 8
        %s171 = scalar_lea.vmem %s0, %s170
      $region28: #{tpu_custom_call.1} parent=23 // pred_fallthru
        _
    $region24: #{tpu_custom_call.1} parent=5 // pred_fallthru
      _
    %p172 = scmp.le.s32.totalorder 1, %s9
    %p173 = scmp.lt.s32.totalorder %s9, 3
    %p174 = pnand %p172, %p173
    %p175 = pneg %p174
    // Predicated region
    $region29: #{tpu_custom_call.1} parent=5 // pred_check
      _
    $region30: #{tpu_custom_call.1} parent=5 // pred_check_branch
      %177 = sbr.rel (%p174) target = $region32
    $region31: #{tpu_custom_call.1} parent=5 // pred_region
      %s178 = ssub.s32 %s9, 1
      %p179 = scmp.lt.s32.totalorder %s18, 1
      %s180 = scalar_select %p179, %s18, 1
      %p181 = scmp.lt.s32.totalorder %s19, 0
      %s182 = scalar_select %p181, %s19, 0
      %s183 = smul.addr %s180, 8
      %s184 = sadd.s32 %s182, %s183
      %s185 = smul.addr %s184, 8
      %s186 = scalar_lea.vmem %s0, %s185
      %p187 = pneg %p49
      %p188 = pneg %p46
      %p189 = scmp.lt.s32.totalorder %s19, 0
      %s190 = scalar_select %p189, %s19, 0
      %s191 = smul.addr %s190, 8
      %s192 = scalar_lea.vmem %s1, %s191
      %p193 = pneg %p75
      %p194 = pneg %p72
      %p195 = scmp.lt.s32.totalorder %s19, 0
      %s196 = scalar_select %p195, %s19, 0
      %s197 = scalar_lea.vmem %s2, %s196
      %p198 = pneg %p101
      %p199 = pneg %p98
      %p200 = pneg %p129
      %p201 = pneg %p126
      %p202 = scmp.lt.s32.totalorder %s18, 1
      %s203 = scalar_select %p202, %s18, 1
      %p204 = scmp.lt.s32.totalorder %s19, 0
      %s205 = scalar_select %p204, %s19, 0
      %s206 = smul.addr %s203, 8
      %s207 = sadd.s32 %s205, %s206
      %s208 = smul.addr %s207, 8
      %s209 = scalar_lea.vmem %s3, %s208
      %p210 = scmp.lt.s32.totalorder %s18, 1
      %s211 = scalar_select %p210, %s18, 1
      %p212 = scmp.lt.s32.totalorder %s19, 0
      %s213 = scalar_select %p212, %s19, 0
      %s214 = smul.addr %s211, 8
      %s215 = sadd.s32 %s213, %s214
      %s216 = smul.addr %s215, 8
      %s217 = scalar_lea.vmem %s0, %s216
      %p218 = scmp.lt.s32.totalorder %s19, 0
      %s219 = scalar_select %p218, %s19, 0
      %s220 = smul.addr %s219, 8
      %s221 = scalar_lea.vmem %s1, %s220
      %p222 = scmp.lt.s32.totalorder %s19, 0
      %s223 = scalar_select %p222, %s19, 0
      %s224 = scalar_lea.vmem %s2, %s223
      %p225 = scmp.lt.s32.totalorder %s18, 1
      %s226 = scalar_select %p225, %s18, 1
      %p227 = scmp.lt.s32.totalorder %s19, 0
      %s228 = scalar_select %p227, %s19, 0
      %s229 = smul.addr %s226, 8
      %s230 = sadd.s32 %s228, %s229
      %s231 = smul.addr %s230, 8
      %s232 = scalar_lea.vmem %s3, %s231
      %v233 = vld [vmem:[%s217] sm:$0xff]
      %v234 = vld [vmem:[%s217 + $0x8] sm:$0xff]
      %v235 = vld [vmem:[%s217 + $0x10] sm:$0xff]
      %v236 = vld [vmem:[%s217 + $0x18] sm:$0xff]
      %v237 = vld [vmem:[%s217 + $0x20] sm:$0xff]
      %v238 = vld [vmem:[%s217 + $0x28] sm:$0xff]
      %v239 = vld [vmem:[%s217 + $0x30] sm:$0xff]
      %v240 = vld [vmem:[%s217 + $0x38] sm:$0xff]
      %v241 = vld [vmem:[%s221] sm:$0xff]
      %v242 = vld [vmem:[%s221 + $0x8] sm:$0x1]
      %v243 = vld [vmem:[%s224] sm:$0x1]
      %v244 = vadd.f32 %v241, 1.0
      %v245 = vlaneseq
      %v246 = vshrl.u32 %v245, 7
      %v247 = vadd.s32 %v246, 8
      %v248 = vadd.s32 %v246, 16
      %v249 = vadd.s32 %v246, 24
      %v250 = vadd.s32 %v246, 32
      %v251 = vadd.s32 %v246, 40
      %v252 = vadd.s32 %v246, 48
      %v253 = vadd.s32 %v246, 56
      %vm254 = vcmp.lt.s32.totalorder %v246, 0
      %v255 = vsub.s32 0, %v246
      %v256 = vsel %vm254, %v255, %v246
      %v257 = vshrl.u32 %v256, 3
      %v258 = vand.u32 %v256, 7
      %v259 = vsub.s32 0, %v258
      %v260 = vsel %vm254, %v259, %v258
      %vm261 = vcmp.lt.s32.totalorder %v247, 0
      %v262 = vsub.s32 0, %v247
      %v263 = vsel %vm261, %v262, %v247
      %v264 = vshrl.u32 %v263, 3
      %v265 = vand.u32 %v263, 7
      %v266 = vsub.s32 0, %v265
      %v267 = vsel %vm261, %v266, %v265
      %vm268 = vcmp.lt.s32.totalorder %v248, 0
      %v269 = vsub.s32 0, %v248
      %v270 = vsel %vm268, %v269, %v248
      %v271 = vshrl.u32 %v270, 3
      %v272 = vand.u32 %v270, 7
      %v273 = vsub.s32 0, %v272
      %v274 = vsel %vm268, %v273, %v272
      %vm275 = vcmp.lt.s32.totalorder %v249, 0
      %v276 = vsub.s32 0, %v249
      %v277 = vsel %vm275, %v276, %v249
      %v278 = vshrl.u32 %v277, 3
      %v279 = vand.u32 %v277, 7
      %v280 = vsub.s32 0, %v279
      %v281 = vsel %vm275, %v280, %v279
      %vm282 = vcmp.lt.s32.totalorder %v250, 0
      %v283 = vsub.s32 0, %v250
      %v284 = vsel %vm282, %v283, %v250
      %v285 = vshrl.u32 %v284, 3
      %v286 = vand.u32 %v284, 7
      %v287 = vsub.s32 0, %v286
      %v288 = vsel %vm282, %v287, %v286
      %vm289 = vcmp.lt.s32.totalorder %v251, 0
      %v290 = vsub.s32 0, %v251
      %v291 = vsel %vm289, %v290, %v251
      %v292 = vshrl.u32 %v291, 3
      %v293 = vand.u32 %v291, 7
      %v294 = vsub.s32 0, %v293
      %v295 = vsel %vm289, %v294, %v293
      %vm296 = vcmp.lt.s32.totalorder %v252, 0
      %v297 = vsub.s32 0, %v252
      %v298 = vsel %vm296, %v297, %v252
      %v299 = vshrl.u32 %v298, 3
      %v300 = vand.u32 %v298, 7
      %v301 = vsub.s32 0, %v300
      %v302 = vsel %vm296, %v301, %v300
      %vm303 = vcmp.lt.s32.totalorder %v253, 0
      %v304 = vsub.s32 0, %v253
      %v305 = vsel %vm303, %v304, %v253
      %v306 = vshrl.u32 %v305, 3
      %v307 = vand.u32 %v305, 7
      %v308 = vsub.s32 0, %v307
      %v309 = vsel %vm303, %v308, %v307
      %vm310 = vcmp.ne.s32.totalorder %v260, 0
      %vm311 = vcmp.ne.s32.totalorder %v267, 0
      %vm312 = vcmp.ne.s32.totalorder %v274, 0
      %vm313 = vcmp.ne.s32.totalorder %v281, 0
      %vm314 = vcmp.ne.s32.totalorder %v288, 0
      %vm315 = vcmp.ne.s32.totalorder %v295, 0
      %vm316 = vcmp.ne.s32.totalorder %v302, 0
      %vm317 = vcmp.ne.s32.totalorder %v309, 0
      %vm318 = vcmp.lt.s32.totalorder %v260, 0
      %vm319 = vcmp.lt.s32.totalorder %v267, 0
      %vm320 = vcmp.lt.s32.totalorder %v274, 0
      %vm321 = vcmp.lt.s32.totalorder %v281, 0
      %vm322 = vcmp.lt.s32.totalorder %v288, 0
      %vm323 = vcmp.lt.s32.totalorder %v295, 0
      %vm324 = vcmp.lt.s32.totalorder %v302, 0
      %vm325 = vcmp.lt.s32.totalorder %v309, 0
      %vm326 = vmand %vm318, %vm310
      %vm327 = vmand %vm319, %vm311
      %vm328 = vmand %vm320, %vm312
      %vm329 = vmand %vm321, %vm313
      %vm330 = vmand %vm322, %vm314
      %vm331 = vmand %vm323, %vm315
      %vm332 = vmand %vm324, %vm316
      %vm333 = vmand %vm325, %vm317
      %v334 = vadd.s32 %v260, 8
      %v335 = vadd.s32 %v267, 8
      %v336 = vadd.s32 %v274, 8
      %v337 = vadd.s32 %v281, 8
      %v338 = vadd.s32 %v288, 8
      %v339 = vadd.s32 %v295, 8
      %v340 = vadd.s32 %v302, 8
      %v341 = vadd.s32 %v309, 8
      %v342 = vsel %vm326, %v334, %v260
      %v343 = vsel %vm327, %v335, %v267
      %v344 = vsel %vm328, %v336, %v274
      %v345 = vsel %vm329, %v337, %v281
      %v346 = vsel %vm330, %v338, %v288
      %v347 = vsel %vm331, %v339, %v295
      %v348 = vsel %vm332, %v340, %v302
      %v349 = vsel %vm333, %v341, %v309
      %vm350 = vcmp.gt.s32.totalorder %v342, 0
      %vm351 = vcmp.gt.s32.totalorder %v343, 0
      %vm352 = vcmp.gt.s32.totalorder %v344, 0
      %vm353 = vcmp.gt.s32.totalorder %v345, 0
      %vm354 = vcmp.gt.s32.totalorder %v346, 0
      %vm355 = vcmp.gt.s32.totalorder %v347, 0
      %vm356 = vcmp.gt.s32.totalorder %v348, 0
      %vm357 = vcmp.gt.s32.totalorder %v349, 0
      %v358 = vsel %vm350, 1, 0
      %v359 = vsel %vm351, 1, 0
      %v360 = vsel %vm352, 1, 0
      %v361 = vsel %vm353, 1, 0
      %v362 = vsel %vm354, 1, 0
      %v363 = vsel %vm355, 1, 0
      %v364 = vsel %vm356, 1, 0
      %v365 = vsel %vm357, 1, 0
      %v366 = vcvt.s32.f32 %v358
      %v367 = vcvt.s32.f32 %v359
      %v368 = vcvt.s32.f32 %v360
      %v369 = vcvt.s32.f32 %v361
      %v370 = vcvt.s32.f32 %v362
      %v371 = vcvt.s32.f32 %v363
      %v372 = vcvt.s32.f32 %v364
      %v373 = vcvt.s32.f32 %v365
      %vm374 = vcmp.lt.s32.totalorder %v342, 7
      %vm375 = vcmp.lt.s32.totalorder %v343, 7
      %vm376 = vcmp.lt.s32.totalorder %v344, 7
      %vm377 = vcmp.lt.s32.totalorder %v345, 7
      %vm378 = vcmp.lt.s32.totalorder %v346, 7
      %vm379 = vcmp.lt.s32.totalorder %v347, 7
      %vm380 = vcmp.lt.s32.totalorder %v348, 7
      %vm381 = vcmp.lt.s32.totalorder %v349, 7
      %v382 = vsel %vm374, 1, 0
      %v383 = vsel %vm375, 1, 0
      %v384 = vsel %vm376, 1, 0
      %v385 = vsel %vm377, 1, 0
      %v386 = vsel %vm378, 1, 0
      %v387 = vsel %vm379, 1, 0
      %v388 = vsel %vm380, 1, 0
      %v389 = vsel %vm381, 1, 0
      %v390 = vcvt.s32.f32 %v382
      %v391 = vcvt.s32.f32 %v383
      %v392 = vcvt.s32.f32 %v384
      %v393 = vcvt.s32.f32 %v385
      %v394 = vcvt.s32.f32 %v386
      %v395 = vcvt.s32.f32 %v387
      %v396 = vcvt.s32.f32 %v388
      %v397 = vcvt.s32.f32 %v389
      %vm398 = vcmp.ge.s32.totalorder %v246, 8
      %vm399 = vcmp.ge.s32.totalorder %v247, 8
      %vm400 = vcmp.ge.s32.totalorder %v248, 8
      %vm401 = vcmp.ge.s32.totalorder %v249, 8
      %vm402 = vcmp.ge.s32.totalorder %v250, 8
      %vm403 = vcmp.ge.s32.totalorder %v251, 8
      %vm404 = vcmp.ge.s32.totalorder %v252, 8
      %vm405 = vcmp.ge.s32.totalorder %v253, 8
      %v406 = vsel %vm398, 1, 0
      %v407 = vsel %vm399, 1, 0
      %v408 = vsel %vm400, 1, 0
      %v409 = vsel %vm401, 1, 0
      %v410 = vsel %vm402, 1, 0
      %v411 = vsel %vm403, 1, 0
      %v412 = vsel %vm404, 1, 0
      %v413 = vsel %vm405, 1, 0
      %v414 = vcvt.s32.f32 %v406
      %v415 = vcvt.s32.f32 %v407
      %v416 = vcvt.s32.f32 %v408
      %v417 = vcvt.s32.f32 %v409
      %v418 = vcvt.s32.f32 %v410
      %v419 = vcvt.s32.f32 %v411
      %v420 = vcvt.s32.f32 %v412
      %v421 = vcvt.s32.f32 %v413
      %vm422 = vcmp.lt.s32.totalorder %v246, 56
      %vm423 = vcmp.lt.s32.totalorder %v247, 56
      %vm424 = vcmp.lt.s32.totalorder %v248, 56
      %vm425 = vcmp.lt.s32.totalorder %v249, 56
      %vm426 = vcmp.lt.s32.totalorder %v250, 56
      %vm427 = vcmp.lt.s32.totalorder %v251, 56
      %vm428 = vcmp.lt.s32.totalorder %v252, 56
      %vm429 = vcmp.lt.s32.totalorder %v253, 56
      %v430 = vsel %vm422, 1, 0
      %v431 = vsel %vm423, 1, 0
      %v432 = vsel %vm424, 1, 0
      %v433 = vsel %vm425, 1, 0
      %v434 = vsel %vm426, 1, 0
      %v435 = vsel %vm427, 1, 0
      %v436 = vsel %vm428, 1, 0
      %v437 = vsel %vm429, 1, 0
      %v438 = vcvt.s32.f32 %v430
      %v439 = vcvt.s32.f32 %v431
      %v440 = vcvt.s32.f32 %v432
      %v441 = vcvt.s32.f32 %v433
      %v442 = vcvt.s32.f32 %v434
      %v443 = vcvt.s32.f32 %v435
      %v444 = vcvt.s32.f32 %v436
      %v445 = vcvt.s32.f32 %v437
      %v446 = vrot.slane %v233, 7
      %v447 = vrot.slane %v234, 7
      %v448 = vrot.slane %v235, 7
      %v449 = vrot.slane %v236, 7
      %v450 = vrot.slane %v237, 7
      %v451 = vrot.slane %v238, 7
      %v452 = vrot.slane %v239, 7
      %v453 = vrot.slane %v240, 7
      %vm454 = vcmp.lt.s32.totalorder %v246, 1
      %v455 = vsel %vm454, %v452, %v453
      %v456 = vsel %vm454, %v451, %v452
      %v457 = vsel %vm454, %v450, %v451
      %v458 = vsel %vm454, %v449, %v450
      %v459 = vsel %vm454, %v448, %v449
      %v460 = vsel %vm454, %v447, %v448
      %v461 = vsel %vm454, %v446, %v447
      %v462 = vsel %vm454, %v453, %v446
      %v463 = vmul.f32 %v462, %v366
      %v464 = vmul.f32 %v461, %v367
      %v465 = vmul.f32 %v460, %v368
      %v466 = vmul.f32 %v459, %v369
      %v467 = vmul.f32 %v458, %v370
      %v468 = vmul.f32 %v457, %v371
      %v469 = vmul.f32 %v456, %v372
      %v470 = vmul.f32 %v455, %v373
      %v471 = vrot.slane %v233, 1
      %v472 = vrot.slane %v234, 1
      %v473 = vrot.slane %v235, 1
      %v474 = vrot.slane %v236, 1
      %v475 = vrot.slane %v237, 1
      %v476 = vrot.slane %v238, 1
      %v477 = vrot.slane %v239, 1
      %v478 = vrot.slane %v240, 1
      %vm479 = vcmp.lt.s32.totalorder %v246, 7
      %v480 = vsel %vm479, %v477, %v478
      %v481 = vsel %vm479, %v476, %v477
      %v482 = vsel %vm479, %v475, %v476
      %v483 = vsel %vm479, %v474, %v475
      %v484 = vsel %vm479, %v473, %v474
      %v485 = vsel %vm479, %v472, %v473
      %v486 = vsel %vm479, %v471, %v472
      %v487 = vsel %vm479, %v478, %v471
      %v488 = vmul.f32 %v486, %v390
      %v489 = vmul.f32 %v485, %v391
      %v490 = vmul.f32 %v484, %v392
      %v491 = vmul.f32 %v483, %v393
      %v492 = vmul.f32 %v482, %v394
      %v493 = vmul.f32 %v481, %v395
      %v494 = vmul.f32 %v480, %v396
      %v495 = vmul.f32 %v487, %v397
      %v496 = vperm.slane %v244, 4
      %v497 = vmul.f32 %v233, %v496
      %v498 = vmul.f32 %v234, %v496
      %v499 = vmul.f32 %v235, %v496
      %v500 = vmul.f32 %v236, %v496
      %v501 = vmul.f32 %v237, %v496
      %v502 = vmul.f32 %v238, %v496
      %v503 = vmul.f32 %v239, %v496
      %v504 = vmul.f32 %v240, %v496
      %v505 = vperm.slane %v241, 3
      %v506 = vmul.f32 %v463, %v505
      %v507 = vmul.f32 %v464, %v505
      %v508 = vmul.f32 %v465, %v505
      %v509 = vmul.f32 %v466, %v505
      %v510 = vmul.f32 %v467, %v505
      %v511 = vmul.f32 %v468, %v505
      %v512 = vmul.f32 %v469, %v505
      %v513 = vmul.f32 %v470, %v505
      %v514 = vadd.f32 %v497, %v506
      %v515 = vadd.f32 %v498, %v507
      %v516 = vadd.f32 %v499, %v508
      %v517 = vadd.f32 %v500, %v509
      %v518 = vadd.f32 %v501, %v510
      %v519 = vadd.f32 %v502, %v511
      %v520 = vadd.f32 %v503, %v512
      %v521 = vadd.f32 %v504, %v513
      %v522 = vperm.slane %v241, 5
      %v523 = vmul.f32 %v488, %v522
      %v524 = vmul.f32 %v489, %v522
      %v525 = vmul.f32 %v490, %v522
      %v526 = vmul.f32 %v491, %v522
      %v527 = vmul.f32 %v492, %v522
      %v528 = vmul.f32 %v493, %v522
      %v529 = vmul.f32 %v494, %v522
      %v530 = vmul.f32 %v495, %v522
      %v531 = vadd.f32 %v514, %v523
      %v532 = vadd.f32 %v515, %v524
      %v533 = vadd.f32 %v516, %v525
      %v534 = vadd.f32 %v517, %v526
      %v535 = vadd.f32 %v518, %v527
      %v536 = vadd.f32 %v519, %v528
      %v537 = vadd.f32 %v520, %v529
      %v538 = vadd.f32 %v521, %v530
      %v540 = vperm.slane %v243, 0
      %v542 = vadd.f32 %v531, %v540
      %v543 = vadd.f32 %v532, %v540
      %v544 = vadd.f32 %v533, %v540
      %v545 = vadd.f32 %v534, %v540
      %v546 = vadd.f32 %v535, %v540
      %v547 = vadd.f32 %v536, %v540
      %v548 = vadd.f32 %v537, %v540
      %v549 = vadd.f32 %v538, %v540
      %v550 = vperm.slane %v241, 1
      %v551 = vmul.f32 %v233, %v550
      %v552 = vmul.f32 %v234, %v550
      %v553 = vmul.f32 %v235, %v550
      %v554 = vmul.f32 %v236, %v550
      %v555 = vmul.f32 %v237, %v550
      %v556 = vmul.f32 %v238, %v550
      %v557 = vmul.f32 %v239, %v550
      %v558 = vmul.f32 %v240, %v550
      %v559 = vperm.slane %v241, 0
      %v560 = vmul.f32 %v463, %v559
      %v561 = vmul.f32 %v464, %v559
      %v562 = vmul.f32 %v465, %v559
      %v563 = vmul.f32 %v466, %v559
      %v564 = vmul.f32 %v467, %v559
      %v565 = vmul.f32 %v468, %v559
      %v566 = vmul.f32 %v469, %v559
      %v567 = vmul.f32 %v470, %v559
      %v568 = vadd.f32 %v551, %v560
      %v569 = vadd.f32 %v552, %v561
      %v570 = vadd.f32 %v553, %v562
      %v571 = vadd.f32 %v554, %v563
      %v572 = vadd.f32 %v555, %v564
      %v573 = vadd.f32 %v556, %v565
      %v574 = vadd.f32 %v557, %v566
      %v575 = vadd.f32 %v558, %v567
      %v576 = vperm.slane %v241, 2
      %v577 = vmul.f32 %v488, %v576
      %v578 = vmul.f32 %v489, %v576
      %v579 = vmul.f32 %v490, %v576
      %v580 = vmul.f32 %v491, %v576
      %v581 = vmul.f32 %v492, %v576
      %v582 = vmul.f32 %v493, %v576
      %v583 = vmul.f32 %v494, %v576
      %v584 = vmul.f32 %v495, %v576
      %v585 = vadd.f32 %v568, %v577
      %v586 = vadd.f32 %v569, %v578
      %v587 = vadd.f32 %v570, %v579
      %v588 = vadd.f32 %v571, %v580
      %v589 = vadd.f32 %v572, %v581
      %v590 = vadd.f32 %v573, %v582
      %v591 = vadd.f32 %v574, %v583
      %v592 = vadd.f32 %v575, %v584
      %v593 = vmul.f32 %v592, %v414
      %v594 = vmul.f32 %v585, %v415
      %v595 = vmul.f32 %v586, %v416
      %v596 = vmul.f32 %v587, %v417
      %v597 = vmul.f32 %v588, %v418
      %v598 = vmul.f32 %v589, %v419
      %v599 = vmul.f32 %v590, %v420
      %v600 = vmul.f32 %v591, %v421
      %v601 = vadd.f32 %v542, %v593
      %v602 = vadd.f32 %v543, %v594
      %v603 = vadd.f32 %v544, %v595
      %v604 = vadd.f32 %v545, %v596
      %v605 = vadd.f32 %v546, %v597
      %v606 = vadd.f32 %v547, %v598
      %v607 = vadd.f32 %v548, %v599
      %v608 = vadd.f32 %v549, %v600
      %v609 = vperm.slane %v241, 7
      %v610 = vmul.f32 %v233, %v609
      %v611 = vmul.f32 %v234, %v609
      %v612 = vmul.f32 %v235, %v609
      %v613 = vmul.f32 %v236, %v609
      %v614 = vmul.f32 %v237, %v609
      %v615 = vmul.f32 %v238, %v609
      %v616 = vmul.f32 %v239, %v609
      %v617 = vmul.f32 %v240, %v609
      %v618 = vperm.slane %v241, 6
      %v619 = vmul.f32 %v463, %v618
      %v620 = vmul.f32 %v464, %v618
      %v621 = vmul.f32 %v465, %v618
      %v622 = vmul.f32 %v466, %v618
      %v623 = vmul.f32 %v467, %v618
      %v624 = vmul.f32 %v468, %v618
      %v625 = vmul.f32 %v469, %v618
      %v626 = vmul.f32 %v470, %v618
      %v627 = vadd.f32 %v610, %v619
      %v628 = vadd.f32 %v611, %v620
      %v629 = vadd.f32 %v612, %v621
      %v630 = vadd.f32 %v613, %v622
      %v631 = vadd.f32 %v614, %v623
      %v632 = vadd.f32 %v615, %v624
      %v633 = vadd.f32 %v616, %v625
      %v634 = vadd.f32 %v617, %v626
      %v635 = vperm.slane %v242, 0
      %v636 = vmul.f32 %v488, %v635
      %v637 = vmul.f32 %v489, %v635
      %v638 = vmul.f32 %v490, %v635
      %v639 = vmul.f32 %v491, %v635
      %v640 = vmul.f32 %v492, %v635
      %v641 = vmul.f32 %v493, %v635
      %v642 = vmul.f32 %v494, %v635
      %v643 = vmul.f32 %v495, %v635
      %v644 = vadd.f32 %v627, %v636
      %v645 = vadd.f32 %v628, %v637
      %v646 = vadd.f32 %v629, %v638
      %v647 = vadd.f32 %v630, %v639
      %v648 = vadd.f32 %v631, %v640
      %v649 = vadd.f32 %v632, %v641
      %v650 = vadd.f32 %v633, %v642
      %v651 = vadd.f32 %v634, %v643
      %v652 = vmul.f32 %v645, %v438
      %v653 = vmul.f32 %v646, %v439
      %v654 = vmul.f32 %v647, %v440
      %v655 = vmul.f32 %v648, %v441
      %v656 = vmul.f32 %v649, %v442
      %v657 = vmul.f32 %v650, %v443
      %v658 = vmul.f32 %v651, %v444
      %v659 = vmul.f32 %v644, %v445
      %v660 = vadd.f32 %v601, %v652
      %v661 = vadd.f32 %v602, %v653
      %v662 = vadd.f32 %v603, %v654
      %v663 = vadd.f32 %v604, %v655
      %v664 = vadd.f32 %v605, %v656
      %v665 = vadd.f32 %v606, %v657
      %v666 = vadd.f32 %v607, %v658
      %v667 = vadd.f32 %v608, %v659
      %vm668 = vcmask 261120
      %669 = vst.msk [vmem:[%s232] sm:$0xff] %vm668, %v660
      %670 = vst.msk [vmem:[%s232 + $0x8] sm:$0xff] %vm668, %v661
      %671 = vst.msk [vmem:[%s232 + $0x10] sm:$0xff] %vm668, %v662
      %672 = vst.msk [vmem:[%s232 + $0x18] sm:$0xff] %vm668, %v663
      %673 = vst.msk [vmem:[%s232 + $0x20] sm:$0xff] %vm668, %v664
      %674 = vst.msk [vmem:[%s232 + $0x28] sm:$0xff] %vm668, %v665
      %675 = vst.msk [vmem:[%s232 + $0x30] sm:$0xff] %vm668, %v666
      %676 = vst.msk [vmem:[%s232 + $0x38] sm:$0xff] %vm668, %v667
      %p677 = scmp.lt.s32.totalorder %s18, 1
      %s678 = scalar_select %p677, %s18, 1
      %p679 = scmp.lt.s32.totalorder %s19, 0
      %s680 = scalar_select %p679, %s19, 0
      %s681 = smul.addr %s678, 8
      %s682 = sadd.s32 %s680, %s681
      %s683 = smul.addr %s682, 8
      %s684 = scalar_lea.vmem %s3, %s683
      // Predicated region
      $region33: #{tpu_custom_call.1} parent=31 // pred_check
        %p685 = pneg %p126
      $region34: #{tpu_custom_call.1} parent=31 // pred_check_branch
        %687 = sbr.rel (%p685) target = $region36
      $region35: #{tpu_custom_call.1} parent=31 // pred_region
        _
      $region36: #{tpu_custom_call.1} parent=31 // pred_fallthru
        _
    $region32: #{tpu_custom_call.1} parent=5 // pred_fallthru
      _
    %p688 = scmp.le.s32.totalorder 2, %s9
    // Predicated region
    $region37: #{tpu_custom_call.1} parent=5 // pred_check
      %p689 = pneg %p688
    $region38: #{tpu_custom_call.1} parent=5 // pred_check_branch
      %691 = sbr.rel (%p689) target = $region40
    $region39: #{tpu_custom_call.1} parent=5 // pred_region
      %s692 = ssub.s32 %s9, 2
      // Predicated region
      $region41: #{tpu_custom_call.1} parent=39 // pred_check
        %p693 = pneg %p132
      $region42: #{tpu_custom_call.1} parent=39 // pred_check_branch
        %695 = sbr.rel (%p693) target = $region44
      $region43: #{tpu_custom_call.1} parent=39 // pred_region
        %p696 = scmp.lt.s32.totalorder %s20, 1
        %s697 = scalar_select %p696, %s20, 1
        %p698 = scmp.lt.s32.totalorder %s21, 0
        %s699 = scalar_select %p698, %s21, 0
        %s700 = smul.addr %s697, 8
        %s701 = sadd.s32 %s699, %s700
        %s702 = smul.addr %s701, 8
        %s703 = scalar_lea.vmem %s3, %s702
      $region44: #{tpu_custom_call.1} parent=39 // pred_fallthru
        _
    $region40: #{tpu_custom_call.1} parent=5 // pred_fallthru
      _
  $region6: #{tpu_custom_call.1} parent=0 // loop_footer
    %s13 = sadd.s32 1, %s9
  $region7: #{tpu_custom_call.1} parent=0 // loop_footer_branch
    %8 = sbr.rel target = $region3
  $region8: #{tpu_custom_call.1} parent=0 // loop_exit
    _

</llo_original>
